<compile_context>
chip_gen: v6e
topology: v6e:2x2x1
jax: 0.10.0
libtpu: 0.0.40
codegen_flags: <defaults>
</compile_context>

<pallas_src>
import functools

import jax
import jax.numpy as jnp
from jax.experimental import pallas as pl
from jax.experimental.pallas import tpu as pltpu

_LANE = 128
_SUBLANE = 8
_CHUNK_ROWS = 512                 # 512*128*4B = 256 KiB f32 per stream per chunk
_MAX_BLOCK_ROWS = 8192            # 4 MiB f32 per input per grid step
_MIN_BLOCK_ROWS = 256             # keep per-step HBM time >> per-step overhead
_SINGLE_BLOCK_ROWS = 512          # at/below this many rows, use one grid step
_TARGET_BLOCKS = 4                # aim for >= 4 blocks so both v7x TCs engage
_VMEM_LIMIT_BYTES = 40 * 1024 * 1024


def _cdiv(a, b):
    return (a + b - 1) // b


def _round_up(x, m):
    return ((x + m - 1) // m) * m


def _sublane_multiple(*dtypes):
    """Sublane tile requirement implied by the narrowest input dtype."""
    s = _SUBLANE
    for dt in dtypes:
        s = max(s, 32 // max(1, jnp.dtype(dt).itemsize))
    return s


def _dice_partials_kernel(x_ref, t_ref, out_ref, *, block_rows, n_elems, flat):
    """Per-block partial sums for DiceLoss.

    out_ref[0] = [sum(sig(x)*t), sum(sig(x)), sum(t)], each folded down to a
    single (8, 128) f32 vreg with per-vreg VPU adds (no cross-lane reduce and
    no SMEM scalar carry in the hot loop).  Cross-vreg/cross-block reduction
    happens in the wrapper epilogue.
    """
    b = pl.program_id(0)
    block_elems = block_rows * _LANE
    if flat:
        has_tail = (n_elems % block_elems) != 0
    else:
        total_rows = n_elems // _LANE
        has_tail = (total_rows % block_rows) != 0

    def load(ref, row_off, nrows):
        if flat:
            start = row_off * _LANE
            if not isinstance(start, int):
                start = pl.multiple_of(start, _LANE)
            # Row-major regrouping of a lane-aligned 1-D chunk; layout-trivial.
            v = ref[pl.ds(start, nrows * _LANE)].reshape(nrows, _LANE)
        else:
            v = ref[pl.ds(row_off, nrows), :]
        return v.astype(jnp.float32)

    def fold(v):  # (nrows, 128) -> (8, 128); nrows % 8 == 0; pure vreg adds
        return jnp.sum(v.reshape(-1, _SUBLANE, _LANE), axis=0)

    def step(row_off, accs, nrows):
        x = load(x_ref, row_off, nrows)
        t = load(t_ref, row_off, nrows)
        xs = 0.5 * (jnp.tanh(0.5 * x) + 1.0)   # sigmoid: one EUP op per vreg
        if has_tail:
            # Zero anything past the end of the (unpadded) input so garbage in
            # Pallas' padded final block cannot leak NaN/Inf into the sums.
            row = (b * block_rows + row_off
                   + jax.lax.broadcasted_iota(jnp.int32, (nrows, _LANE), 0))
            if flat:
                lane = jax.lax.broadcasted_iota(jnp.int32, (nrows, _LANE), 1)
                valid = row * _LANE + lane < n_elems
            else:
                valid = row < (n_elems // _LANE)
            xs = jnp.where(valid, xs, 0.0)
            t = jnp.where(valid, t, 0.0)
        acc_i, acc_x, acc_t = accs
        return (acc_i + fold(xs * t), acc_x + fold(xs), acc_t + fold(t))

    zeros = jnp.zeros((_SUBLANE, _LANE), jnp.float32)
    accs = (zeros, zeros, zeros)

    n_full = block_rows // _CHUNK_ROWS
    rem = block_rows % _CHUNK_ROWS          # static; multiple of 8 by design
    if n_full > 0:
        def body(c, carry):
            off = pl.multiple_of(c * _CHUNK_ROWS, _CHUNK_ROWS)
            return step(off, carry, _CHUNK_ROWS)
        accs = jax.lax.fori_loop(0, n_full, body, accs)
    if rem:
        accs = step(n_full * _CHUNK_ROWS, accs, rem)

    out_ref[0, 0] = accs[0]
    out_ref[0, 1] = accs[1]
    out_ref[0, 2] = accs[2]


def _jnp_sums(x, t):
    xs = jax.nn.sigmoid(x.astype(jnp.float32))
    tf = t.astype(jnp.float32)
    return jnp.sum(xs * tf), jnp.sum(xs), jnp.sum(tf)


def _dice_from_sums(s_inter, s_x, s_t, smooth):
    smooth = jnp.float32(smooth)
    dice = (2.0 * s_inter + smooth) / (s_x + s_t + smooth)
    return jnp.float32(1.0) - dice


def _pick_block_rows(rows):
    """Rows per grid step in the multi-block regime: a multiple of 32
    (dtype-robust), targeting >= _TARGET_BLOCKS blocks for v7x's two
    TensorCores, floored so per-step overhead stays amortized and capped at
    4 MiB f32 per input per step."""
    return min(_MAX_BLOCK_ROWS,
               max(_MIN_BLOCK_ROWS, _round_up(_cdiv(rows, _TARGET_BLOCKS), 32)))


def dice_loss(inputs, targets, smooth=1.0):
    """Pallas implementation of DiceLoss.forward (returns a scalar)."""
    x = inputs.reshape(-1)    # native dtype; cast to f32 happens on-chip
    t = targets.reshape(-1)
    n = x.shape[0]

    rows = n // _LANE                         # whole 128-lane rows
    sub = _sublane_multiple(x.dtype, t.dtype)

    # Tiny inputs: below tiling granularity / not worth a kernel launch.
    if rows < sub:
        return _dice_from_sums(*_jnp_sums(x, t), smooth)

    if n % (_SUBLANE * _LANE) == 0:
        # numel is a multiple of 1024: a free reshape gives (rows, 128) slabs.
        flat = False
        block_rows = rows if rows <= _SINGLE_BLOCK_ROWS else _pick_block_rows(rows)
        grid = _cdiv(rows, block_rows)
        x_in = x.reshape(rows, _LANE)
        t_in = t.reshape(rows, _LANE)
        in_specs = [pl.BlockSpec((block_rows, _LANE), lambda b: (b, 0)),
                    pl.BlockSpec((block_rows, _LANE), lambda b: (b, 0))]
    else:
        # Ragged numel: stream the flat 1-D array directly (no jnp.pad and no
        # prefix-slice copy); the in-kernel mask zeroes the ragged tail of the
        # final partial block.
        flat = True
        if rows <= _SINGLE_BLOCK_ROWS:
            block_rows = (rows // sub) * sub        # <= rows, multiple of sub
        else:
            block_rows = _pick_block_rows(rows)
        block_elems = block_rows * _LANE
        grid = _cdiv(n, block_elems)
        x_in, t_in = x, t
        in_specs = [pl.BlockSpec((block_elems,), lambda b: (b,)),
                    pl.BlockSpec((block_elems,), lambda b: (b,))]

    kernel = functools.partial(_dice_partials_kernel, block_rows=block_rows,
                               n_elems=n, flat=flat)

    partials = pl.pallas_call(
        kernel,
        out_shape=jax.ShapeDtypeStruct((grid, 3, _SUBLANE, _LANE), jnp.float32),
        grid_spec=pltpu.PrefetchScalarGridSpec(
            num_scalar_prefetch=0,
            grid=(grid,),
            in_specs=in_specs,
            out_specs=pl.BlockSpec((1, 3, _SUBLANE, _LANE),
                                   lambda b: (b, 0, 0, 0)),
        ),
        compiler_params=pltpu.CompilerParams(
            # Per-block partials are independent: let the runtime shard grid
            # blocks across TensorCores on multi-core chips (v7x).
            dimension_semantics=("parallel",),
            vmem_limit_bytes=_VMEM_LIMIT_BYTES,
        ),
    )(x_in, t_in)

    # Tiny epilogue: combine per-block/per-lane partials, apply dice formula.
    sums = jnp.sum(partials, axis=(0, 2, 3))   # (3,)
    return _dice_from_sums(sums[0], sums[1], sums[2], smooth)


def dice_loss_ref(inputs, targets, smooth=1.0):
    """Pure-JAX reference matching the PyTorch forward exactly."""
    x = jax.nn.sigmoid(inputs.astype(jnp.float32)).reshape(-1)
    t = targets.astype(jnp.float32).reshape(-1)
    intersection = jnp.sum(x * t)
    dice = (2.0 * intersection + smooth) / (jnp.sum(x) + jnp.sum(t) + smooth)
    return 1.0 - dice


if __name__ == "__main__":
    key = jax.random.PRNGKey(0)
    k1, k2 = jax.random.split(key)

    # NCHW-like shapes, consistent with a segmentation logit / mask pair.
    B, C, H, W = 2, 4, 16, 16
    inputs = jax.random.normal(k1, (B, C, H, W), dtype=jnp.float32)
    targets = (jax.random.uniform(k2, (B, C, H, W)) > 0.5).astype(jnp.float32)

    loss = jax.block_until_ready(dice_loss(inputs, targets, smooth=1.0))
    ref = jax.block_until_ready(dice_loss_ref(inputs, targets, smooth=1.0))

    assert jnp.allclose(loss, ref, atol=1e-5, rtol=1e-5), (loss, ref)
    print("KERNEL_OK")
</pallas_src>

<mosaic_0001>
module attributes {stable_mosaic.version = 11 : i64} {
  func.func @_dice_partials_kernel(%arg0: i32, %arg1: memref<16x128xf32, #tpu.memory_space<vmem>>, %arg2: memref<16x128xf32, #tpu.memory_space<vmem>>, %arg3: memref<1x3x8x128xf32, #tpu.memory_space<vmem>>) attributes {dimension_semantics = [#tpu.dimension_semantics<parallel>], iteration_bounds = array<i64: 1>, scalar_prefetch = 0 : i64, scratch_operands = 0 : i64, tpu.core_type = #tpu.core_type<tc>, window_params = [{transform_indices = @transform_0, window_bounds = array<i64: 16, 128>}, {transform_indices = @transform_1, window_bounds = array<i64: 16, 128>}, {transform_indices = @transform_2, window_bounds = array<i64: 1, 3, 8, 128>}]} {
    %cst = arith.constant 0.000000e+00 : f32
    %0 = vector.broadcast %cst : f32 to vector<8x128xf32>
    %c0 = arith.constant 0 : index
    %c0_0 = arith.constant 0 : index
    %1 = vector.load %arg1[%c0, %c0_0] : memref<16x128xf32, #tpu.memory_space<vmem>>, vector<16x128xf32>
    %c0_1 = arith.constant 0 : index
    %c0_2 = arith.constant 0 : index
    %2 = vector.load %arg2[%c0_1, %c0_2] : memref<16x128xf32, #tpu.memory_space<vmem>>, vector<16x128xf32>
    %cst_3 = arith.constant 5.000000e-01 : f32
    %3 = vector.broadcast %cst_3 : f32 to vector<16x128xf32>
    %4 = arith.mulf %3, %1 : vector<16x128xf32>
    %5 = math.tanh %4 : vector<16x128xf32>
    %cst_4 = arith.constant 1.000000e+00 : f32
    %6 = vector.broadcast %cst_4 : f32 to vector<16x128xf32>
    %7 = arith.addf %5, %6 : vector<16x128xf32>
    %cst_5 = arith.constant 5.000000e-01 : f32
    %8 = vector.broadcast %cst_5 : f32 to vector<16x128xf32>
    %9 = arith.mulf %8, %7 : vector<16x128xf32>
    %10 = arith.mulf %9, %2 : vector<16x128xf32>
    %11 = vector.shape_cast %10 : vector<16x128xf32> to vector<2x8x128xf32>
    %cst_6 = arith.constant dense<0.000000e+00> : vector<8x128xf32>
    %12 = vector.multi_reduction <add>, %11, %cst_6 [0] : vector<2x8x128xf32> to vector<8x128xf32>
    %13 = arith.addf %0, %12 : vector<8x128xf32>
    %14 = vector.shape_cast %9 : vector<16x128xf32> to vector<2x8x128xf32>
    %cst_7 = arith.constant dense<0.000000e+00> : vector<8x128xf32>
    %15 = vector.multi_reduction <add>, %14, %cst_7 [0] : vector<2x8x128xf32> to vector<8x128xf32>
    %16 = arith.addf %0, %15 : vector<8x128xf32>
    %17 = vector.shape_cast %2 : vector<16x128xf32> to vector<2x8x128xf32>
    %cst_8 = arith.constant dense<0.000000e+00> : vector<8x128xf32>
    %18 = vector.multi_reduction <add>, %17, %cst_8 [0] : vector<2x8x128xf32> to vector<8x128xf32>
    %19 = arith.addf %0, %18 : vector<8x128xf32>
    %c0_9 = arith.constant 0 : index
    %c0_10 = arith.constant 0 : index
    %c0_11 = arith.constant 0 : index
    %c0_12 = arith.constant 0 : index
    %20 = vector.load %arg3[%c0_9, %c0_10, %c0_11, %c0_12] : memref<1x3x8x128xf32, #tpu.memory_space<vmem>>, vector<1x1x8x128xf32>
    %21 = vector.shape_cast %20 : vector<1x1x8x128xf32> to vector<8x128xf32>
    %22 = vector.shape_cast %13 : vector<8x128xf32> to vector<1x1x8x128xf32>
    tpu.vector_store %arg3[%c0_9, %c0_10, %c0_11, %c0_12], %22 {strides = array<i32>} : memref<1x3x8x128xf32, #tpu.memory_space<vmem>>, vector<1x1x8x128xf32>,
    %c0_13 = arith.constant 0 : index
    %c1 = arith.constant 1 : index
    %c0_14 = arith.constant 0 : index
    %c0_15 = arith.constant 0 : index
    %23 = vector.load %arg3[%c0_13, %c1, %c0_14, %c0_15] : memref<1x3x8x128xf32, #tpu.memory_space<vmem>>, vector<1x1x8x128xf32>
    %24 = vector.shape_cast %23 : vector<1x1x8x128xf32> to vector<8x128xf32>
    %25 = vector.shape_cast %16 : vector<8x128xf32> to vector<1x1x8x128xf32>
    tpu.vector_store %arg3[%c0_13, %c1, %c0_14, %c0_15], %25 {strides = array<i32>} : memref<1x3x8x128xf32, #tpu.memory_space<vmem>>, vector<1x1x8x128xf32>,
    %c0_16 = arith.constant 0 : index
    %c2 = arith.constant 2 : index
    %c0_17 = arith.constant 0 : index
    %c0_18 = arith.constant 0 : index
    %26 = vector.load %arg3[%c0_16, %c2, %c0_17, %c0_18] : memref<1x3x8x128xf32, #tpu.memory_space<vmem>>, vector<1x1x8x128xf32>
    %27 = vector.shape_cast %26 : vector<1x1x8x128xf32> to vector<8x128xf32>
    %28 = vector.shape_cast %19 : vector<8x128xf32> to vector<1x1x8x128xf32>
    tpu.vector_store %arg3[%c0_16, %c2, %c0_17, %c0_18], %28 {strides = array<i32>} : memref<1x3x8x128xf32, #tpu.memory_space<vmem>>, vector<1x1x8x128xf32>,
    return
  }
  func.func @transform_0(%arg0: i32) -> (i32, i32) {
    %c0_i32 = arith.constant 0 : i32
    %c0_i32_0 = arith.constant 0 : i32
    return %arg0, %c0_i32 : i32, i32
  }
  func.func @transform_1(%arg0: i32) -> (i32, i32) {
    %c0_i32 = arith.constant 0 : i32
    %c0_i32_0 = arith.constant 0 : i32
    return %arg0, %c0_i32 : i32, i32
  }
  func.func @transform_2(%arg0: i32) -> (i32, i32, i32, i32) {
    %c0_i32 = arith.constant 0 : i32
    %c0_i32_0 = arith.constant 0 : i32
    %c0_i32_1 = arith.constant 0 : i32
    %c0_i32_2 = arith.constant 0 : i32
    return %arg0, %c0_i32, %c0_i32_0, %c0_i32_1 : i32, i32, i32, i32
  }
}

</mosaic_0001>

<llo_original>
// kernel: tpu_custom_call.1
$region0: #{tpu_custom_call.1}
  #allocation0 [shape = 'u32[]', space=smem, size = 0x4, offset = 0x4, fixed_abs, tag = 'smem constant byte address 0x4 - core index']
  #allocation1 [shape = 'u32[144,128]{1,0:T(1,128)}', space=vmem, size = 0x12000, scoped, tag = 'internal scratch']
  %s0 = inlined_call_operand.hbm [shape: f32[16,128], index: 0, kind: input, shape index: {}]
  %s1 = inlined_call_operand.hbm [shape: f32[16,128], index: 1, kind: input, shape index: {}]
  %s2 = inlined_call_operand.hbm [shape: f32[1,3,8,128], index: 2, kind: output, shape index: {}]
  %s3 = sld [smem:[#allocation0]]
  $region26: #{tpu_custom_call.1} parent=0
    _
  %s5 = ssub.s32 1, %s3
  %s6 = scalar_select 0, %s5, %s3
  $region1: #{tpu_custom_call.1} parent=0
    #allocation2 [shape = 'u8[8192]{0}', space=vmem, size = 0x2000, scoped, tag = 'input window, operand 0, single buffered']
    #allocation3 [shape = 's32[1]{0}', space=sflag, size = 0x4, scoped, tag = 'scoped memory for tpu_custom_call.1']
    #allocation4 [shape = 's32[1]{0}', space=sflag, size = 0x4, scoped, tag = 'scoped memory for tpu_custom_call.1']
    #allocation5 [shape = 'u8[8192]{0}', space=vmem, size = 0x2000, scoped, tag = 'input window, operand 1, single buffered']
    #allocation6 [shape = 's32[1]{0}', space=sflag, size = 0x4, scoped, tag = 'scoped memory for tpu_custom_call.1']
    #allocation7 [shape = 'u8[12288]{0}', space=vmem, size = 0x3000, scoped, tag = 'output window, operand 0, single buffered']
    %7 = vsyncpa [#allocation3], 0
    %8 = vsyncpa [#allocation6], 0
    %9 = vsyncpa [#allocation4], 0
    // Predicated region
    $region2: #{tpu_custom_call.1} parent=1 // pred_check
      _
    $region3: #{tpu_custom_call.1} parent=1 // pred_check_branch
      %11 = sbr.rel (0) target = $region5
    $region4: #{tpu_custom_call.1} parent=1 // pred_region
      %s13 = ssub.s32 256, 256
      %14 = vsyncadd [#allocation3], %s13
      %s15 = sshll.u32 [#allocation2], 4
      %s16 = int_to_ptr.vmem [resolvable:$true] %s15
      %21 = dma.hbm_to_vmem [thread:$0]  %s0, 256, %s16, [#allocation3], 128, 128, 8
    $region5: #{tpu_custom_call.1} parent=1 // pred_fallthru
      _
    // Predicated region
    $region6: #{tpu_custom_call.1} parent=1 // pred_check
      _
    $region7: #{tpu_custom_call.1} parent=1 // pred_check_branch
      %23 = sbr.rel (0) target = $region9
    $region8: #{tpu_custom_call.1} parent=1 // pred_region
      %s25 = ssub.s32 256, 256
      %26 = vsyncadd [#allocation6], %s25
      %s27 = sshll.u32 [#allocation5], 4
      %s28 = int_to_ptr.vmem [resolvable:$true] %s27
      %33 = dma.hbm_to_vmem [thread:$0]  %s1, 256, %s28, [#allocation6], 128, 128, 8
    $region9: #{tpu_custom_call.1} parent=1 // pred_fallthru
      _
    // Predicated region
    $region10: #{tpu_custom_call.1} parent=1 // pred_check
      _
    $region11: #{tpu_custom_call.1} parent=1 // pred_check_branch
      %35 = sbr.rel (0) target = $region13
    $region12: #{tpu_custom_call.1} parent=1 // pred_region
      %36 = dma.done [#allocation3], 256
    $region13: #{tpu_custom_call.1} parent=1 // pred_fallthru
      _
    // Predicated region
    $region14: #{tpu_custom_call.1} parent=1 // pred_check
      _
    $region15: #{tpu_custom_call.1} parent=1 // pred_check_branch
      %38 = sbr.rel (0) target = $region17
    $region16: #{tpu_custom_call.1} parent=1 // pred_region
      %39 = dma.done [#allocation6], 256
    $region17: #{tpu_custom_call.1} parent=1 // pred_fallthru
      _
    %v40 = vld [vmem:[#allocation2] sm:$0xff]
    %v41 = vld [vmem:[#allocation2 + $0x8] sm:$0xff]
    %v42 = vld [vmem:[#allocation5] sm:$0xff]
    %v43 = vld [vmem:[#allocation5 + $0x8] sm:$0xff]
    %v44 = vmul.f32 %v40, 0.5
    %v45 = vmul.f32 %v41, 0.5
    %v46 = vtanh.pop %v44
    %v47 = vtanh.pop %v45
    %v48 = vadd.f32 %v46, 1.0
    %v49 = vadd.f32 %v47, 1.0
    %v50 = vmul.f32 %v48, 0.5
    %v51 = vmul.f32 %v49, 0.5
    %v52 = vmul.f32 %v50, %v42
    %v53 = vmul.f32 %v51, %v43
    %v54 = vadd.f32 %v52, %v53
    %v55 = vadd.f32 %v54, 0.0
    %v56 = vadd.f32 %v50, %v51
    %v57 = vadd.f32 %v56, 0.0
    %v58 = vadd.f32 %v42, %v43
    %v59 = vadd.f32 %v58, 0.0
    %60 = vst [vmem:[#allocation7] sm:$0xff] %v55
    %s61 = scalar_lea.vmem [#allocation7], 8
    %62 = vst [vmem:[%s61] sm:$0xff] %v57
    %s63 = scalar_lea.vmem [#allocation7], 16
    %64 = vst [vmem:[%s63] sm:$0xff] %v59
    // Predicated region
    $region18: #{tpu_custom_call.1} parent=1 // pred_check
      _
    $region19: #{tpu_custom_call.1} parent=1 // pred_check_branch
      %66 = sbr.rel (0) target = $region21
    $region20: #{tpu_custom_call.1} parent=1 // pred_region
      %s68 = ssub.s32 384, 384
      %69 = vsyncadd [#allocation4], %s68
      %s70 = sshll.u32 [#allocation7], 4
      %s71 = int_to_ptr.vmem [resolvable:$true] %s70
      %76 = dma.vmem_to_hbm [thread:$0]  %s71, 384, %s2, [#allocation4], 128, 128, 8
    $region21: #{tpu_custom_call.1} parent=1 // pred_fallthru
      _
    // Predicated region
    $region22: #{tpu_custom_call.1} parent=1 // pred_check
      _
    $region23: #{tpu_custom_call.1} parent=1 // pred_check_branch
      %78 = sbr.rel (0) target = $region25
    $region24: #{tpu_custom_call.1} parent=1 // pred_region
      %79 = dma.done [#allocation4], 384
    $region25: #{tpu_custom_call.1} parent=1 // pred_fallthru
      _
    %80 = vsyncpa [#allocation3], 1
    %81 = vsyncpa [#allocation6], 1
    %82 = vsyncpa [#allocation4], 1

</llo_original>
